<compile_context>
chip_gen: v7x
topology: tpu7x:2x2x1
jax: 0.10.0
libtpu: 0.0.40
codegen_flags: <defaults>
</compile_context>

<pallas_src>
import jax
import jax.numpy as jnp
from jax.experimental import pallas as pl
from jax.experimental.pallas import tpu as pltpu

MAX_TILE_B = 32768  # safe on v7x (64 MiB VMEM/TC) with the ~0.35 KB/elem budget
MIN_TILE_B = 128    # lane width


def mlp_kernel(x_ref, w1_ref, b1_ref, w2_ref, b2_ref, w3_ref, b3_ref, o_ref):
    # x_ref: (4, TILE_B)  lane-dense, batch on lanes
    # w1: (l1, 4)   b1: (l1, 1)
    # w2: (l2, l1)  b2: (l2, 1)
    # w3: (l2, 1)   b3: (1, 1)
    # o_ref: (1, TILE_B)

    # Layer 1: (l1, 4) @ (4, TILE_B) -> (l1, TILE_B).  Contraction dim already
    # on sublanes of both operands: feeds the MXU with no relayout.
    h1 = jnp.dot(w1_ref[...], x_ref[...], preferred_element_type=jnp.float32)
    h1 = jnp.maximum(h1 + b1_ref[...], 0.0)

    # Layer 2: (l2, l1) @ (l1, TILE_B) -> (l2, TILE_B)
    h2 = jnp.dot(w2_ref[...], h1, preferred_element_type=jnp.float32)
    h2 = jnp.maximum(h2 + b2_ref[...], 0.0)

    # Layer 3 (out_features = 1): VPU multiply + sublane reduction, skip the MXU.
    out = jnp.sum(w3_ref[...] * h2, axis=0, keepdims=True) + b3_ref[...]
    o_ref[...] = out.astype(o_ref.dtype)  # (1, TILE_B): lane-dense unmasked store


def prepare_params(params):
    """One-time conversion of torch-layout params to kernel layout."""
    w1, b1, w2, b2, w3, b3 = params
    l1 = w1.shape[0]
    l2 = w2.shape[0]
    return (
        w1,                      # (l1, 4)   used as-is (W @ x^T layout)
        b1.reshape(l1, 1),       # column bias, broadcasts over lanes
        w2,                      # (l2, l1)  used as-is
        b2.reshape(l2, 1),
        w3.reshape(l2, 1),       # torch (1, l2) -> column (l2, 1)
        b3.reshape(1, 1),
    )


def _tile_b_for(batch):
    tile = max(MIN_TILE_B, pl.next_power_of_2(batch))
    return min(tile, MAX_TILE_B)


def net_forward(x, prepared):
    """Forward pass of Net.  x: (B, 4) float32.  Returns (B, 1) float32."""
    w1, b1c, w2, b2c, w3c, b3c = prepared
    B, F = x.shape
    l1 = w1.shape[0]
    l2 = w2.shape[0]

    tile_b = _tile_b_for(B)
    num_tiles = pl.cdiv(B, tile_b)
    B_pad = num_tiles * tile_b

    # Single fused relayout: pad + transpose into a lane-dense (F, B_pad) slab
    # (one write pass; no separate jnp.pad copy of the full input).
    if B_pad == B:
        xt = x.T
    else:
        xt = jnp.zeros((F, B_pad), x.dtype).at[:, :B].set(x.T)

    def const(arr):
        return pl.BlockSpec(arr.shape, lambda i: (0, 0))

    param_elems = (w1.size + b1c.size + w2.size + b2c.size + w3c.size + b3c.size)
    flops = 2 * B * (F * l1 + l1 * l2 + l2)
    bytes_accessed = 4 * (B_pad * (F + 1) + param_elems)

    # VMEM budget: x + output double-buffered plus f32 h1/h2 temporaries,
    # plus the resident params; 1.5x headroom, capped at v7x's 64 MiB/TC.
    vmem_est = 4 * tile_b * (2 * F + 2 + l1 + l2) + 4 * param_elems
    vmem_limit = int(min(max(int(vmem_est * 1.5) + (4 << 20), 16 << 20), 64 << 20))

    out_row = pl.pallas_call(
        mlp_kernel,
        out_shape=jax.ShapeDtypeStruct((1, B_pad), jnp.float32),
        grid=(num_tiles,),
        in_specs=[
            pl.BlockSpec((F, tile_b), lambda i: (0, i)),   # x tile follows the grid
            const(w1), const(b1c),                         # weights/biases VMEM-resident
            const(w2), const(b2c),
            const(w3c), const(b3c),
        ],
        out_specs=pl.BlockSpec((1, tile_b), lambda i: (0, i)),  # lane-dense output
        compiler_params=pltpu.CompilerParams(
            dimension_semantics=("parallel",),
            vmem_limit_bytes=vmem_limit),
        cost_estimate=pl.CostEstimate(
            flops=flops, transcendentals=0, bytes_accessed=bytes_accessed),
    )(xt, w1, b1c, w2, b2c, w3c, b3c)

    return out_row[0, :B].reshape(B, 1)


def init_params(key, l1, l2):
    """Deterministic init mimicking torch.nn.Linear default (uniform +/- 1/sqrt(fan_in))."""
    ks = jax.random.split(key, 6)

    def lin(kw, kb, fan_in, fan_out):
        bound = 1.0 / jnp.sqrt(float(fan_in))
        w = jax.random.uniform(kw, (fan_out, fan_in), jnp.float32, -bound, bound)
        b = jax.random.uniform(kb, (fan_out,), jnp.float32, -bound, bound)
        return w, b

    w1, b1 = lin(ks[0], ks[1], 4, l1)
    w2, b2 = lin(ks[2], ks[3], l1, l2)
    w3, b3 = lin(ks[4], ks[5], l2, 1)
    return (w1, b1, w2, b2, w3, b3)


def reference_forward(x, params):
    w1, b1, w2, b2, w3, b3 = params
    h = jnp.maximum(x @ w1.T + b1, 0.0)
    h = jnp.maximum(h @ w2.T + b2, 0.0)
    return h @ w3.T + b3


if __name__ == "__main__":
    key = jax.random.PRNGKey(0)
    k_params, k_x = jax.random.split(key)

    l1, l2 = 32, 32
    batch = 8

    params = init_params(k_params, l1, l2)
    prepared = prepare_params(params)           # layout conversion done once
    x = jax.random.normal(k_x, (batch, 4), dtype=jnp.float32)

    fwd = jax.jit(net_forward)
    out = jax.block_until_ready(fwd(x, prepared))

    ref = reference_forward(x, params)
    assert out.shape == (batch, 1)
    assert jnp.allclose(out, ref, atol=1e-5, rtol=1e-5), "mismatch vs reference"

    print("KERNEL_OK")
</pallas_src>

<mosaic_0001>
module attributes {stable_mosaic.version = 11 : i64} {
  func.func @mlp_kernel(%arg0: i32, %arg1: memref<4x128xf32, #tpu.memory_space<vmem>>, %arg2: memref<32x4xf32, #tpu.memory_space<vmem>>, %arg3: memref<32x1xf32, #tpu.memory_space<vmem>>, %arg4: memref<32x32xf32, #tpu.memory_space<vmem>>, %arg5: memref<32x1xf32, #tpu.memory_space<vmem>>, %arg6: memref<32x1xf32, #tpu.memory_space<vmem>>, %arg7: memref<1x1xf32, #tpu.memory_space<vmem>>, %arg8: memref<1x128xf32, #tpu.memory_space<vmem>>) attributes {dimension_semantics = [#tpu.dimension_semantics<parallel>], iteration_bounds = array<i64: 1>, scalar_prefetch = 0 : i64, scratch_operands = 0 : i64, tpu.core_type = #tpu.core_type<tc>, window_params = [{transform_indices = @transform_0, window_bounds = array<i64: 4, 128>}, {pipeline_mode = #tpu.pipeline_mode<synchronous>, transform_indices = @transform_1, window_bounds = array<i64: 32, 4>}, {pipeline_mode = #tpu.pipeline_mode<synchronous>, transform_indices = @transform_2, window_bounds = array<i64: 32, 1>}, {pipeline_mode = #tpu.pipeline_mode<synchronous>, transform_indices = @transform_3, window_bounds = array<i64: 32, 32>}, {pipeline_mode = #tpu.pipeline_mode<synchronous>, transform_indices = @transform_4, window_bounds = array<i64: 32, 1>}, {pipeline_mode = #tpu.pipeline_mode<synchronous>, transform_indices = @transform_5, window_bounds = array<i64: 32, 1>}, {pipeline_mode = #tpu.pipeline_mode<synchronous>, transform_indices = @transform_6, window_bounds = array<i64: 1, 1>}, {transform_indices = @transform_7, window_bounds = array<i64: 1, 128>}]} {
    %c0 = arith.constant 0 : index
    %c0_0 = arith.constant 0 : index
    %0 = vector.load %arg2[%c0, %c0_0] : memref<32x4xf32, #tpu.memory_space<vmem>>, vector<32x4xf32>
    %c0_1 = arith.constant 0 : index
    %c0_2 = arith.constant 0 : index
    %1 = vector.load %arg1[%c0_1, %c0_2] : memref<4x128xf32, #tpu.memory_space<vmem>>, vector<4x128xf32>
    %cst = arith.constant dense<0.000000e+00> : vector<32x128xf32>
    %2 = tpu.matmul %0, %1, %cst {dimension_numbers = #tpu.dot_dimension_numbers<[1], [0], [0], [1], [0, 0, 1, 1], [], []>} : vector<32x4xf32>, vector<4x128xf32>, vector<32x128xf32> -> vector<32x128xf32>
    %c0_3 = arith.constant 0 : index
    %c0_4 = arith.constant 0 : index
    %3 = vector.load %arg3[%c0_3, %c0_4] : memref<32x1xf32, #tpu.memory_space<vmem>>, vector<32x1xf32>
    %4 = vector.broadcast %3 : vector<32x1xf32> to vector<32x128xf32>
    %5 = arith.addf %2, %4 : vector<32x128xf32>
    %cst_5 = arith.constant 0.000000e+00 : f32
    %6 = vector.broadcast %cst_5 : f32 to vector<32x128xf32>
    %7 = arith.maximumf %5, %6 : vector<32x128xf32>
    %c0_6 = arith.constant 0 : index
    %c0_7 = arith.constant 0 : index
    %8 = vector.load %arg4[%c0_6, %c0_7] : memref<32x32xf32, #tpu.memory_space<vmem>>, vector<32x32xf32>
    %cst_8 = arith.constant dense<0.000000e+00> : vector<32x128xf32>
    %9 = tpu.matmul %8, %7, %cst_8 {dimension_numbers = #tpu.dot_dimension_numbers<[1], [0], [0], [1], [0, 0, 1, 1], [], []>} : vector<32x32xf32>, vector<32x128xf32>, vector<32x128xf32> -> vector<32x128xf32>
    %c0_9 = arith.constant 0 : index
    %c0_10 = arith.constant 0 : index
    %10 = vector.load %arg5[%c0_9, %c0_10] : memref<32x1xf32, #tpu.memory_space<vmem>>, vector<32x1xf32>
    %11 = vector.broadcast %10 : vector<32x1xf32> to vector<32x128xf32>
    %12 = arith.addf %9, %11 : vector<32x128xf32>
    %cst_11 = arith.constant 0.000000e+00 : f32
    %13 = vector.broadcast %cst_11 : f32 to vector<32x128xf32>
    %14 = arith.maximumf %12, %13 : vector<32x128xf32>
    %c0_12 = arith.constant 0 : index
    %c0_13 = arith.constant 0 : index
    %15 = vector.load %arg6[%c0_12, %c0_13] : memref<32x1xf32, #tpu.memory_space<vmem>>, vector<32x1xf32>
    %16 = vector.broadcast %15 : vector<32x1xf32> to vector<32x128xf32>
    %17 = arith.mulf %16, %14 : vector<32x128xf32>
    %cst_14 = arith.constant dense<0.000000e+00> : vector<128xf32>
    %18 = vector.multi_reduction <add>, %17, %cst_14 [0] : vector<32x128xf32> to vector<128xf32>
    %19 = vector.shape_cast %18 : vector<128xf32> to vector<1x128xf32>
    %c0_15 = arith.constant 0 : index
    %c0_16 = arith.constant 0 : index
    %20 = vector.load %arg7[%c0_15, %c0_16] : memref<1x1xf32, #tpu.memory_space<vmem>>, vector<1x1xf32>
    %21 = vector.broadcast %20 : vector<1x1xf32> to vector<1x128xf32>
    %22 = arith.addf %19, %21 : vector<1x128xf32>
    %c0_17 = arith.constant 0 : index
    %c0_18 = arith.constant 0 : index
    %23 = vector.load %arg8[%c0_17, %c0_18] : memref<1x128xf32, #tpu.memory_space<vmem>>, vector<1x128xf32>
    tpu.vector_store %arg8[%c0_17, %c0_18], %22 {strides = array<i32>} : memref<1x128xf32, #tpu.memory_space<vmem>>, vector<1x128xf32>,
    return
  }
  func.func @transform_0(%arg0: i32) -> (i32, i32) {
    %c0_i32 = arith.constant 0 : i32
    %c0_i32_0 = arith.constant 0 : i32
    return %c0_i32, %arg0 : i32, i32
  }
  func.func @transform_1(%arg0: i32) -> (i32, i32) {
    %c0_i32 = arith.constant 0 : i32
    %c0_i32_0 = arith.constant 0 : i32
    %c0_i32_1 = arith.constant 0 : i32
    return %c0_i32, %c0_i32_0 : i32, i32
  }
  func.func @transform_2(%arg0: i32) -> (i32, i32) {
    %c0_i32 = arith.constant 0 : i32
    %c0_i32_0 = arith.constant 0 : i32
    %c0_i32_1 = arith.constant 0 : i32
    return %c0_i32, %c0_i32_0 : i32, i32
  }
  func.func @transform_3(%arg0: i32) -> (i32, i32) {
    %c0_i32 = arith.constant 0 : i32
    %c0_i32_0 = arith.constant 0 : i32
    %c0_i32_1 = arith.constant 0 : i32
    return %c0_i32, %c0_i32_0 : i32, i32
  }
  func.func @transform_4(%arg0: i32) -> (i32, i32) {
    %c0_i32 = arith.constant 0 : i32
    %c0_i32_0 = arith.constant 0 : i32
    %c0_i32_1 = arith.constant 0 : i32
    return %c0_i32, %c0_i32_0 : i32, i32
  }
  func.func @transform_5(%arg0: i32) -> (i32, i32) {
    %c0_i32 = arith.constant 0 : i32
    %c0_i32_0 = arith.constant 0 : i32
    %c0_i32_1 = arith.constant 0 : i32
    return %c0_i32, %c0_i32_0 : i32, i32
  }
  func.func @transform_6(%arg0: i32) -> (i32, i32) {
    %c0_i32 = arith.constant 0 : i32
    %c0_i32_0 = arith.constant 0 : i32
    %c0_i32_1 = arith.constant 0 : i32
    return %c0_i32, %c0_i32_0 : i32, i32
  }
  func.func @transform_7(%arg0: i32) -> (i32, i32) {
    %c0_i32 = arith.constant 0 : i32
    %c0_i32_0 = arith.constant 0 : i32
    return %c0_i32, %arg0 : i32, i32
  }
}

</mosaic_0001>

<llo_original>
// kernel: net_forward.1
$region0: #{net_forward.1}
  #allocation0 [shape = 'u32[]', space=smem, size = 0x4, offset = 0x4, fixed_abs, tag = 'smem constant byte address 0x4 - core index']
  #allocation1 [shape = 'u32[144,128]{1,0:T(1,128)}', space=vmem, size = 0x12000, scoped, tag = 'internal scratch']
  #allocation2 [shape = 'f32[1,1]{1,0:T(1,128)S(1)}', space=vmem, size = 0x200, scoped, tag = 'scoped memory for net_forward.1']
  %s0 = inlined_call_operand.vmem [shape: f32[4,128], index: 0, kind: input, shape index: {}]
  %s1 = inlined_call_operand.vmem [shape: f32[32,4], index: 1, kind: input, shape index: {}]
  %s2 = inlined_call_operand.vmem [shape: f32[32,1], index: 2, kind: input, shape index: {}]
  %s3 = inlined_call_operand.vmem [shape: f32[32,32], index: 3, kind: input, shape index: {}]
  %s4 = inlined_call_operand.vmem [shape: f32[32,1], index: 4, kind: input, shape index: {}]
  %s5 = inlined_call_operand.vmem [shape: f32[32,1], index: 5, kind: input, shape index: {}]
  %s6 = inlined_call_operand.<no memory space> [shape: f32[1,1], index: 6, kind: input, shape index: {}]
  %s7 = inlined_call_operand.vmem [shape: f32[1,128], index: 7, kind: output, shape index: {}]
  %s8 = sld [smem:[#allocation0]]
  $region38: #{net_forward.1} parent=0
    _
  %s10 = ssub.s32 1, %s8
  %s11 = scalar_select 0, %s10, %s8
  %v12 = vstv %s6
  %13 = vst [vmem:[#allocation2] sm:$0x1] %v12
  // Predicated region
  $region2: #{net_forward.1} parent=0 // pred_check
    _
  $region3: #{net_forward.1} parent=0 // pred_check_branch
    %15 = sbr.rel (0) target = $region5
  $region4: #{net_forward.1} parent=0 // pred_region
    _
  $region5: #{net_forward.1} parent=0 // pred_fallthru
    _
  // Predicated region
  $region6: #{net_forward.1} parent=0 // pred_check
    _
  $region7: #{net_forward.1} parent=0 // pred_check_branch
    %17 = sbr.rel (0) target = $region9
  $region8: #{net_forward.1} parent=0 // pred_region
    _
  $region9: #{net_forward.1} parent=0 // pred_fallthru
    _
  // Predicated region
  $region10: #{net_forward.1} parent=0 // pred_check
    _
  $region11: #{net_forward.1} parent=0 // pred_check_branch
    %19 = sbr.rel (0) target = $region13
  $region12: #{net_forward.1} parent=0 // pred_region
    _
  $region13: #{net_forward.1} parent=0 // pred_fallthru
    _
  // Predicated region
  $region14: #{net_forward.1} parent=0 // pred_check
    _
  $region15: #{net_forward.1} parent=0 // pred_check_branch
    %21 = sbr.rel (0) target = $region17
  $region16: #{net_forward.1} parent=0 // pred_region
    _
  $region17: #{net_forward.1} parent=0 // pred_fallthru
    _
  // Predicated region
  $region18: #{net_forward.1} parent=0 // pred_check
    _
  $region19: #{net_forward.1} parent=0 // pred_check_branch
    %23 = sbr.rel (0) target = $region21
  $region20: #{net_forward.1} parent=0 // pred_region
    _
  $region21: #{net_forward.1} parent=0 // pred_fallthru
    _
  // Predicated region
  $region22: #{net_forward.1} parent=0 // pred_check
    _
  $region23: #{net_forward.1} parent=0 // pred_check_branch
    %25 = sbr.rel (0) target = $region25
  $region24: #{net_forward.1} parent=0 // pred_region
    _
  $region25: #{net_forward.1} parent=0 // pred_fallthru
    _
  // Predicated region
  $region26: #{net_forward.1} parent=0 // pred_check
    _
  $region27: #{net_forward.1} parent=0 // pred_check_branch
    %27 = sbr.rel (0) target = $region29
  $region28: #{net_forward.1} parent=0 // pred_region
    _
  $region29: #{net_forward.1} parent=0 // pred_fallthru
    _
  %v28 = vld [vmem:[%s1] sm:$0xff]
  %v29 = vld [vmem:[%s1 + $0x8] sm:$0xff]
  %v30 = vld [vmem:[%s1 + $0x10] sm:$0xff]
  %v31 = vld [vmem:[%s1 + $0x18] sm:$0xff]
  %v32 = vld [vmem:[%s0] sm:$0xf]
  %v33 = vld [vmem:[%s2] sm:$0xff]
  %v34 = vld [vmem:[%s2 + $0x8] sm:$0xff]
  %v35 = vld [vmem:[%s2 + $0x10] sm:$0xff]
  %v36 = vld [vmem:[%s2 + $0x18] sm:$0xff]
  %38 = vset.pattern.permute.xlu0 0
  %39 = vperm.xlu0 %38, %v33
  %v40 = vpop.permute.xlu0 %39
  %43 = vset.pattern.permute.xlu0 0
  %44 = vperm.xlu0 %43, %v34
  %v45 = vpop.permute.xlu0 %44
  %48 = vset.pattern.permute.xlu0 0
  %49 = vperm.xlu0 %48, %v35
  %v50 = vpop.permute.xlu0 %49
  %53 = vset.pattern.permute.xlu0 0
  %54 = vperm.xlu0 %53, %v36
  %v55 = vpop.permute.xlu0 %54
  %vm57 = vcmask 31744
  %v59 = vsel %vm57, %v28, 0
  %v62 = vsel %vm57, %v29, 0
  %v65 = vsel %vm57, %v30, 0
  %v68 = vsel %vm57, %v31, 0
  %vm70 = vcmask 1043456
  %v72 = vsel %vm70, %v32, 0
  %74 = vmatprep.subr.mxu0 0.0
  %75 = vmatpush1.msra.mxu0 %v72
  %76 = vmatprep.subr.mxu0 0.0
  %77 = vmatpush1.msra.mxu0 0.0
  %78 = vmatprep.subr.mxu0 0.0
  %79 = vmatpush1.msra.mxu0 0.0
  %80 = vmatprep.subr.mxu0 0.0
  %81 = vmatpush1.msra.mxu0 0.0
  %82 = vmatprep.subr.mxu0 0.0
  %83 = vmatpush1.msra.mxu0 0.0
  %84 = vmatprep.subr.mxu0 0.0
  %85 = vmatpush1.msra.mxu0 0.0
  %86 = vmatprep.subr.mxu0 0.0
  %87 = vmatpush1.msra.mxu0 0.0
  %88 = vmatprep.subr.mxu0 0.0
  %89 = vmatpush1.msra.mxu0 0.0
  %90 = vmatprep.subr.mxu0 0.0
  %91 = vmatpush1.msra.mxu0 0.0
  %92 = vmatprep.subr.mxu0 0.0
  %93 = vmatpush1.msra.mxu0 0.0
  %94 = vmatprep.subr.mxu0 0.0
  %95 = vmatpush1.msra.mxu0 0.0
  %96 = vmatprep.subr.mxu0 0.0
  %97 = vmatpush1.msra.mxu0 0.0
  %98 = vmatprep.subr.mxu0 0.0
  %99 = vmatpush1.msra.mxu0 0.0
  %100 = vmatprep.subr.mxu0 0.0
  %101 = vmatpush1.msra.mxu0 0.0
  %102 = vmatprep.subr.mxu0 0.0
  %103 = vmatpush1.msra.mxu0 0.0
  %104 = vmatprep.subr.mxu0 0.0
  %105 = vmatpush1.msra.mxu0 0.0
  %106 = vmatprep.subr.mxu0 0.0
  %107 = vmatpush1.msra.mxu0 0.0
  %108 = vmatprep.subr.mxu0 0.0
  %109 = vmatpush1.msra.mxu0 0.0
  %110 = vmatprep.subr.mxu0 0.0
  %111 = vmatpush1.msra.mxu0 0.0
  %112 = vmatprep.subr.mxu0 0.0
  %113 = vmatpush1.msra.mxu0 0.0
  %114 = vmatprep.subr.mxu0 0.0
  %115 = vmatpush1.msra.mxu0 0.0
  %116 = vmatprep.subr.mxu0 0.0
  %117 = vmatpush1.msra.mxu0 0.0
  %118 = vmatprep.subr.mxu0 0.0
  %119 = vmatpush1.msra.mxu0 0.0
  %120 = vmatprep.subr.mxu0 0.0
  %121 = vmatpush1.msra.mxu0 0.0
  %122 = vmatprep.subr.mxu0 0.0
  %123 = vmatpush1.msra.mxu0 0.0
  %124 = vmatprep.subr.mxu0 0.0
  %125 = vmatpush1.msra.mxu0 0.0
  %126 = vmatprep.subr.mxu0 0.0
  %127 = vmatpush1.msra.mxu0 0.0
  %128 = vmatprep.subr.mxu0 0.0
  %129 = vmatpush1.msra.mxu0 0.0
  %130 = vmatprep.subr.mxu0 0.0
  %131 = vmatpush1.msra.mxu0 0.0
  %132 = vmatprep.subr.mxu0 0.0
  %133 = vmatpush1.msra.mxu0 0.0
  %134 = vmatprep.subr.mxu0 0.0
  %135 = vmatpush1.msra.mxu0 0.0
  %136 = vmatprep.subr.mxu0 0.0
  %137 = vmatpush1.msra.mxu0 0.0
  %138 = vmatprep.mubr.f32.mxu0 0.0
  %139 = vmatmul.mubr.f32.gmra.mrb[0].mxu0 %v59
  %v140 = vpop.f32.mrb[0].mxu0
  %v141 = vadd.f32 %v40, %v140
  %v142 = vpop.f32.mrb[0].mxu0
  %143 = vmatprep.mubr.f32.mxu0 0.0
  %144 = vmatmul.mubr.f32.gmra.mrb[0].mxu0 %v62
  %v145 = vpop.f32.mrb[0].mxu0
  %v146 = vadd.f32 %v45, %v145
  %v147 = vpop.f32.mrb[0].mxu0
  %148 = vmatprep.mubr.f32.mxu0 0.0
  %149 = vmatmul.mubr.f32.gmra.mrb[0].mxu0 %v65
  %v150 = vpop.f32.mrb[0].mxu0
  %v151 = vadd.f32 %v50, %v150
  %v152 = vpop.f32.mrb[0].mxu0
  %153 = vmatprep.mubr.f32.mxu0 0.0
  %154 = vmatmul.mubr.f32.gmra.mrb[0].mxu0 %v68
  %v155 = vpop.f32.mrb[0].mxu0
  %v156 = vadd.f32 %v55, %v155
  %v157 = vpop.f32.mrb[0].mxu0
  %158 = vdwg.mxu0
  %v159 = vmax.f32 %v141, 0.0
  %v160 = vmax.f32 %v146, 0.0
  %v161 = vmax.f32 %v151, 0.0
  %v162 = vmax.f32 %v156, 0.0
  %v163 = vld [vmem:[%s3] sm:$0xff]
  %v164 = vld [vmem:[%s3 + $0x8] sm:$0xff]
  %v165 = vld [vmem:[%s3 + $0x10] sm:$0xff]
  %v166 = vld [vmem:[%s3 + $0x18] sm:$0xff]
  %v167 = vld [vmem:[%s4] sm:$0xff]
  %v168 = vld [vmem:[%s4 + $0x8] sm:$0xff]
  %v169 = vld [vmem:[%s4 + $0x10] sm:$0xff]
  %v170 = vld [vmem:[%s4 + $0x18] sm:$0xff]
  %172 = vset.pattern.permute.xlu0 0
  %173 = vperm.xlu0 %172, %v167
  %v174 = vpop.permute.xlu0 %173
  %177 = vset.pattern.permute.xlu0 0
  %178 = vperm.xlu0 %177, %v168
  %v179 = vpop.permute.xlu0 %178
  %182 = vset.pattern.permute.xlu0 0
  %183 = vperm.xlu0 %182, %v169
  %v184 = vpop.permute.xlu0 %183
  %187 = vset.pattern.permute.xlu0 0
  %188 = vperm.xlu0 %187, %v170
  %v189 = vpop.permute.xlu0 %188
  %vm191 = vcmask 261120
  %v193 = vsel %vm191, %v163, 0
  %v196 = vsel %vm191, %v164, 0
  %v199 = vsel %vm191, %v165, 0
  %v202 = vsel %vm191, %v166, 0
  %204 = vmatprep.subr.mxu0 0.0
  %205 = vmatpush1.msra.mxu0 %v159
  %206 = vmatprep.subr.mxu0 0.0
  %207 = vmatpush1.msra.mxu0 %v160
  %208 = vmatprep.subr.mxu0 0.0
  %209 = vmatpush1.msra.mxu0 %v161
  %210 = vmatprep.subr.mxu0 0.0
  %211 = vmatpush1.msra.mxu0 %v162
  %212 = vmatprep.subr.mxu0 0.0
  %213 = vmatpush1.msra.mxu0 0.0
  %214 = vmatprep.subr.mxu0 0.0
  %215 = vmatpush1.msra.mxu0 0.0
  %216 = vmatprep.subr.mxu0 0.0
  %217 = vmatpush1.msra.mxu0 0.0
  %218 = vmatprep.subr.mxu0 0.0
  %219 = vmatpush1.msra.mxu0 0.0
  %220 = vmatprep.subr.mxu0 0.0
  %221 = vmatpush1.msra.mxu0 0.0
  %222 = vmatprep.subr.mxu0 0.0
  %223 = vmatpush1.msra.mxu0 0.0
  %224 = vmatprep.subr.mxu0 0.0
  %225 = vmatpush1.msra.mxu0 0.0
  %226 = vmatprep.subr.mxu0 0.0
  %227 = vmatpush1.msra.mxu0 0.0
  %228 = vmatprep.subr.mxu0 0.0
  %229 = vmatpush1.msra.mxu0 0.0
  %230 = vmatprep.subr.mxu0 0.0
  %231 = vmatpush1.msra.mxu0 0.0
  %232 = vmatprep.subr.mxu0 0.0
  %233 = vmatpush1.msra.mxu0 0.0
  %234 = vmatprep.subr.mxu0 0.0
  %235 = vmatpush1.msra.mxu0 0.0
  %236 = vmatprep.subr.mxu0 0.0
  %237 = vmatpush1.msra.mxu0 0.0
  %238 = vmatprep.subr.mxu0 0.0
  %239 = vmatpush1.msra.mxu0 0.0
  %240 = vmatprep.subr.mxu0 0.0
  %241 = vmatpush1.msra.mxu0 0.0
  %242 = vmatprep.subr.mxu0 0.0
  %243 = vmatpush1.msra.mxu0 0.0
  %244 = vmatprep.subr.mxu0 0.0
  %245 = vmatpush1.msra.mxu0 0.0
  %246 = vmatprep.subr.mxu0 0.0
  %247 = vmatpush1.msra.mxu0 0.0
  %248 = vmatprep.subr.mxu0 0.0
  %249 = vmatpush1.msra.mxu0 0.0
  %250 = vmatprep.subr.mxu0 0.0
  %251 = vmatpush1.msra.mxu0 0.0
  %252 = vmatprep.subr.mxu0 0.0
  %253 = vmatpush1.msra.mxu0 0.0
  %254 = vmatprep.subr.mxu0 0.0
  %255 = vmatpush1.msra.mxu0 0.0
  %256 = vmatprep.subr.mxu0 0.0
  %257 = vmatpush1.msra.mxu0 0.0
  %258 = vmatprep.subr.mxu0 0.0
  %259 = vmatpush1.msra.mxu0 0.0
  %260 = vmatprep.subr.mxu0 0.0
  %261 = vmatpush1.msra.mxu0 0.0
  %262 = vmatprep.subr.mxu0 0.0
  %263 = vmatpush1.msra.mxu0 0.0
  %264 = vmatprep.subr.mxu0 0.0
  %265 = vmatpush1.msra.mxu0 0.0
  %266 = vmatprep.subr.mxu0 0.0
  %267 = vmatpush1.msra.mxu0 0.0
  %268 = vmatprep.mubr.f32.mxu0 0.0
  %269 = vmatmul.mubr.f32.gmra.mrb[0].mxu0 %v193
  %v270 = vpop.f32.mrb[0].mxu0
  %v271 = vadd.f32 %v174, %v270
  %v272 = vpop.f32.mrb[0].mxu0
  %273 = vmatprep.mubr.f32.mxu0 0.0
  %274 = vmatmul.mubr.f32.gmra.mrb[0].mxu0 %v196
  %v275 = vpop.f32.mrb[0].mxu0
  %v276 = vadd.f32 %v179, %v275
  %v277 = vpop.f32.mrb[0].mxu0
  %278 = vmatprep.mubr.f32.mxu0 0.0
  %279 = vmatmul.mubr.f32.gmra.mrb[0].mxu0 %v199
  %v280 = vpop.f32.mrb[0].mxu0
  %v281 = vadd.f32 %v184, %v280
  %v282 = vpop.f32.mrb[0].mxu0
  %283 = vmatprep.mubr.f32.mxu0 0.0
  %284 = vmatmul.mubr.f32.gmra.mrb[0].mxu0 %v202
  %v285 = vpop.f32.mrb[0].mxu0
  %v286 = vadd.f32 %v189, %v285
  %v287 = vpop.f32.mrb[0].mxu0
  %288 = vdwg.mxu0
  %v289 = vmax.f32 %v271, 0.0
  %v290 = vmax.f32 %v276, 0.0
  %v291 = vmax.f32 %v281, 0.0
  %v292 = vmax.f32 %v286, 0.0
  %v293 = vld [vmem:[%s5] sm:$0xff]
  %v294 = vld [vmem:[%s5 + $0x8] sm:$0xff]
  %v295 = vld [vmem:[%s5 + $0x10] sm:$0xff]
  %v296 = vld [vmem:[%s5 + $0x18] sm:$0xff]
  %298 = vset.pattern.permute.xlu0 0
  %299 = vperm.xlu0 %298, %v293
  %v300 = vpop.permute.xlu0 %299
  %303 = vset.pattern.permute.xlu0 0
  %304 = vperm.xlu0 %303, %v294
  %v305 = vpop.permute.xlu0 %304
  %308 = vset.pattern.permute.xlu0 0
  %309 = vperm.xlu0 %308, %v295
  %v310 = vpop.permute.xlu0 %309
  %313 = vset.pattern.permute.xlu0 0
  %314 = vperm.xlu0 %313, %v296
  %v315 = vpop.permute.xlu0 %314
  %v317 = vmul.f32 %v300, %v289
  %v318 = vmul.f32 %v305, %v290
  %v319 = vmul.f32 %v310, %v291
  %v320 = vmul.f32 %v315, %v292
  %v321 = vadd.f32 %v317, %v318
  %v322 = vadd.f32 %v321, %v319
  %v323 = vadd.f32 %v322, %v320
  %v324 = vrot.slane %v323, 4
  %v325 = vadd.f32 %v323, %v324
  %v326 = vrot.slane %v325, 2
  %v327 = vadd.f32 %v325, %v326
  %v328 = vrot.slane %v327, 1
  %v329 = vadd.f32 %v327, %v328
  %v330 = vld [vmem:[#allocation2] sm:$0x1]
  %332 = vset.pattern.permute.xlu0 0
  %333 = vperm.xlu0 %332, %v330
  %v334 = vpop.permute.xlu0 %333
  %v336 = vlaneseq
  %v337 = vshrl.u32 %v336, 7
  %v338 = vsub.s32 0, %v337
  %v339 = vrot.slane %v334, %v338
  %v340 = vadd.f32 %v329, %v339
  %341 = vst [vmem:[%s7] sm:$0x1] %v340
  // Predicated region
  $region30: #{net_forward.1} parent=0 // pred_check
    _
  $region31: #{net_forward.1} parent=0 // pred_check_branch
    %343 = sbr.rel (0) target = $region33
  $region32: #{net_forward.1} parent=0 // pred_region
    _
  $region33: #{net_forward.1} parent=0 // pred_fallthru
    _
  // Predicated region
  $region34: #{net_forward.1} parent=0 // pred_check
    _
  $region35: #{net_forward.1} parent=0 // pred_check_branch
    %345 = sbr.rel (0) target = $region37
  $region36: #{net_forward.1} parent=0 // pred_region
    _
  $region37: #{net_forward.1} parent=0 // pred_fallthru
    _

</llo_original>
